<compile_context>
chip_gen: v7x
topology: tpu7x:2x2x1
jax: 0.10.0
libtpu: 0.0.40
codegen_flags: <defaults>
</compile_context>

<pallas_src>
import jax
import jax.numpy as jnp
import numpy as np
from jax.experimental import pallas as pl
from jax.experimental.pallas import tpu as pltpu

_LANE = 128
_SUBLANE = 8
_MAX_COLS = 4096                       # lane-dense slab target width
_TARGET_TILE_BYTES = 2 * 1024 * 1024   # per-tensor per-tile VMEM budget


def _copy_pair_kernel(x1_ref, x2_ref, o1_ref, o2_ref):
    # Straight ref-to-ref copy: no casts, no extra VPU work (mem-bound floor).
    o1_ref[...] = x1_ref[...]
    o2_ref[...] = x2_ref[...]


def _lane_dense_shape(total):
    """Pick (rows, cols) with cols a wide multiple of 128 that divides total."""
    if total % _LANE != 0:
        # Fallback: single full-extent row (block == full array dims is legal).
        return 1, total
    cols = _LANE
    while cols * 2 <= _MAX_COLS and total % (cols * 2) == 0:
        cols *= 2
    return total // cols, cols


def image_embedding_forward(image1, image2, rev=False):
    """Pallas forward of ImageEmbeddingModule base class (identity, invertible).

    image1, image2: (B, C, H, W) arrays (NCHW, like PyTorch).
    Returns two (B, C, H, W) arrays of the same shape/dtype.
    """
    assert image1.shape == image2.shape and image1.dtype == image2.dtype
    assert image1.ndim == 4, "expected NCHW 4D inputs"
    B, C, H, W = image1.shape
    total = B * C * H * W

    rows, cols = _lane_dense_shape(total)
    x1 = image1.reshape(rows, cols)
    x2 = image2.reshape(rows, cols)

    itemsize = jnp.dtype(image1.dtype).itemsize
    # Rows per tile: ~2 MiB per tensor per tile, rounded down to a multiple of 8.
    tile_r = max(_SUBLANE,
                 (_TARGET_TILE_BYTES // (cols * itemsize)) // _SUBLANE * _SUBLANE)
    if tile_r >= rows:
        # Single block along rows; block equals full dim so the (8,128) rule holds.
        tile_r = rows

    grid = (pl.cdiv(rows, tile_r),)
    spec = pl.BlockSpec((tile_r, cols), lambda i: (i, 0))

    out1, out2 = pl.pallas_call(
        _copy_pair_kernel,
        grid=grid,
        in_specs=[spec, spec],
        out_specs=[spec, spec],
        out_shape=(
            jax.ShapeDtypeStruct((rows, cols), x1.dtype),
            jax.ShapeDtypeStruct((rows, cols), x2.dtype),
        ),
        # Identity scaffold: let XLA reuse the operand HBM buffers when it can.
        input_output_aliases={0: 0, 1: 1},
        compiler_params=pltpu.CompilerParams(
            dimension_semantics=("parallel",),
            vmem_limit_bytes=32 * 1024 * 1024,
        ),
    )(x1, x2)

    y1 = out1.reshape(B, C, H, W)
    y2 = out2.reshape(B, C, H, W)
    # rev=False and rev=True are both identity for the base class.
    return y1, y2


if __name__ == "__main__":
    key = jax.random.PRNGKey(0)
    k1, k2 = jax.random.split(key)

    batch, channels, height, width = 2, 4, 16, 16
    image1 = jax.random.normal(k1, (batch, channels, height, width), dtype=jnp.float32)
    image2 = jax.random.normal(k2, (batch, channels, height, width), dtype=jnp.float32)

    # Snapshot host copies before the call (outputs may alias operand buffers).
    ref1 = np.asarray(image1)
    ref2 = np.asarray(image2)

    y1, y2 = image_embedding_forward(image1, image2, rev=False)
    y1 = jax.block_until_ready(y1)
    y2 = jax.block_until_ready(y2)

    assert y1.shape == (batch, channels, height, width)
    assert y2.shape == (batch, channels, height, width)
    assert y1.dtype == image1.dtype and y2.dtype == image2.dtype
    assert np.allclose(np.asarray(y1), ref1)
    assert np.allclose(np.asarray(y2), ref2)

    # Exercise the reverse path as well (also identity for the base class).
    r1, r2 = image_embedding_forward(y1, y2, rev=True)
    jax.block_until_ready((r1, r2))
    assert np.allclose(np.asarray(r1), ref1)
    assert np.allclose(np.asarray(r2), ref2)

    print("KERNEL_OK")
</pallas_src>

<mosaic_0001>
module attributes {stable_mosaic.version = 11 : i64} {
  func.func @_copy_pair_kernel(%arg0: i32, %arg1: memref<1x2048xf32, #tpu.memory_space<vmem>>, %arg2: memref<1x2048xf32, #tpu.memory_space<vmem>>, %arg3: memref<1x2048xf32, #tpu.memory_space<vmem>>, %arg4: memref<1x2048xf32, #tpu.memory_space<vmem>>) attributes {dimension_semantics = [#tpu.dimension_semantics<parallel>], iteration_bounds = array<i64: 1>, scalar_prefetch = 0 : i64, scratch_operands = 0 : i64, tpu.core_type = #tpu.core_type<tc>, window_params = [{transform_indices = @transform_0, window_bounds = array<i64: 1, 2048>}, {transform_indices = @transform_1, window_bounds = array<i64: 1, 2048>}, {transform_indices = @transform_2, window_bounds = array<i64: 1, 2048>}, {transform_indices = @transform_3, window_bounds = array<i64: 1, 2048>}]} {
    %c0 = arith.constant 0 : index
    %c0_0 = arith.constant 0 : index
    %0 = vector.load %arg1[%c0, %c0_0] : memref<1x2048xf32, #tpu.memory_space<vmem>>, vector<1x2048xf32>
    %c0_1 = arith.constant 0 : index
    %c0_2 = arith.constant 0 : index
    %1 = vector.load %arg3[%c0_1, %c0_2] : memref<1x2048xf32, #tpu.memory_space<vmem>>, vector<1x2048xf32>
    tpu.vector_store %arg3[%c0_1, %c0_2], %0 {strides = array<i32>} : memref<1x2048xf32, #tpu.memory_space<vmem>>, vector<1x2048xf32>,
    %c0_3 = arith.constant 0 : index
    %c0_4 = arith.constant 0 : index
    %2 = vector.load %arg2[%c0_3, %c0_4] : memref<1x2048xf32, #tpu.memory_space<vmem>>, vector<1x2048xf32>
    %c0_5 = arith.constant 0 : index
    %c0_6 = arith.constant 0 : index
    %3 = vector.load %arg4[%c0_5, %c0_6] : memref<1x2048xf32, #tpu.memory_space<vmem>>, vector<1x2048xf32>
    tpu.vector_store %arg4[%c0_5, %c0_6], %2 {strides = array<i32>} : memref<1x2048xf32, #tpu.memory_space<vmem>>, vector<1x2048xf32>,
    return
  }
  func.func @transform_0(%arg0: i32) -> (i32, i32) {
    %c0_i32 = arith.constant 0 : i32
    %c0_i32_0 = arith.constant 0 : i32
    return %arg0, %c0_i32 : i32, i32
  }
  func.func @transform_1(%arg0: i32) -> (i32, i32) {
    %c0_i32 = arith.constant 0 : i32
    %c0_i32_0 = arith.constant 0 : i32
    return %arg0, %c0_i32 : i32, i32
  }
  func.func @transform_2(%arg0: i32) -> (i32, i32) {
    %c0_i32 = arith.constant 0 : i32
    %c0_i32_0 = arith.constant 0 : i32
    return %arg0, %c0_i32 : i32, i32
  }
  func.func @transform_3(%arg0: i32) -> (i32, i32) {
    %c0_i32 = arith.constant 0 : i32
    %c0_i32_0 = arith.constant 0 : i32
    return %arg0, %c0_i32 : i32, i32
  }
}

</mosaic_0001>

<llo_original>
// kernel: tpu_custom_call.1
$region0: #{tpu_custom_call.1}
  #allocation0 [shape = 'u32[]', space=smem, size = 0x4, offset = 0x4, fixed_abs, tag = 'smem constant byte address 0x4 - core index']
  #allocation1 [shape = 'u32[144,128]{1,0:T(1,128)}', space=vmem, size = 0x12000, scoped, tag = 'internal scratch']
  %s0 = inlined_call_operand.hbm [shape: f32[1,2048], index: 0, kind: input, shape index: {}, may-alias: {0,2}]
  %s1 = inlined_call_operand.hbm [shape: f32[1,2048], index: 1, kind: input, shape index: {}, may-alias: {1,3}]
  %s2 = inlined_call_operand.hbm [shape: f32[1,2048], index: 2, kind: output, shape index: {0}, may-alias: {0,2}]
  %s3 = inlined_call_operand.hbm [shape: f32[1,2048], index: 3, kind: output, shape index: {1}, may-alias: {1,3}]
  %4 = xla_tuple %s2, %s3
  %s5 = sld [smem:[#allocation0]]
  $region34: #{tpu_custom_call.1} parent=0
    _
  %s7 = ssub.s32 1, %s5
  %s8 = scalar_select 0, %s7, %s5
  $region1: #{tpu_custom_call.1} parent=0
    #allocation2 [shape = 'u8[8192]{0}', space=vmem, size = 0x2000, scoped, tag = 'input window, operand 0, single buffered']
    #allocation3 [shape = 's32[1]{0}', space=sflag, size = 0x4, scoped, tag = 'scoped memory for tpu_custom_call.1']
    #allocation4 [shape = 's32[1]{0}', space=sflag, size = 0x4, scoped, tag = 'scoped memory for tpu_custom_call.1']
    #allocation5 [shape = 'u8[8192]{0}', space=vmem, size = 0x2000, scoped, tag = 'input window, operand 1, single buffered']
    #allocation6 [shape = 's32[1]{0}', space=sflag, size = 0x4, scoped, tag = 'scoped memory for tpu_custom_call.1']
    #allocation7 [shape = 'u8[8192]{0}', space=vmem, size = 0x2000, scoped, tag = 'output window, operand 0, single buffered']
    #allocation8 [shape = 'u8[8192]{0}', space=vmem, size = 0x2000, scoped, tag = 'output window, operand 1, single buffered']
    #allocation9 [shape = 's32[1]{0}', space=sflag, size = 0x4, scoped, tag = 'scoped memory for tpu_custom_call.1']
    %9 = vsyncpa [#allocation3], 0
    %10 = vsyncpa [#allocation6], 0
    %11 = vsyncpa [#allocation4], 0
    %12 = vsyncpa [#allocation9], 0
    // Predicated region
    $region2: #{tpu_custom_call.1} parent=1 // pred_check
      _
    $region3: #{tpu_custom_call.1} parent=1 // pred_check_branch
      %14 = sbr.rel (0) target = $region5
    $region4: #{tpu_custom_call.1} parent=1 // pred_region
      %s16 = ssub.s32 256, 256
      %17 = vsyncadd [#allocation3], %s16
      %s19 = sshll.u32 [#allocation2], 4
      %s20 = int_to_ptr.vmem [resolvable:$true] %s19
      %22 = dma.hbm_to_vmem [thread:$0]  %s0, 256, %s20, [#allocation3]
    $region5: #{tpu_custom_call.1} parent=1 // pred_fallthru
      _
    // Predicated region
    $region6: #{tpu_custom_call.1} parent=1 // pred_check
      _
    $region7: #{tpu_custom_call.1} parent=1 // pred_check_branch
      %24 = sbr.rel (0) target = $region9
    $region8: #{tpu_custom_call.1} parent=1 // pred_region
      %s26 = ssub.s32 256, 256
      %27 = vsyncadd [#allocation6], %s26
      %s29 = sshll.u32 [#allocation5], 4
      %s30 = int_to_ptr.vmem [resolvable:$true] %s29
      %32 = dma.hbm_to_vmem [thread:$0]  %s1, 256, %s30, [#allocation6]
    $region9: #{tpu_custom_call.1} parent=1 // pred_fallthru
      _
    // Predicated region
    $region10: #{tpu_custom_call.1} parent=1 // pred_check
      _
    $region11: #{tpu_custom_call.1} parent=1 // pred_check_branch
      %34 = sbr.rel (0) target = $region13
    $region12: #{tpu_custom_call.1} parent=1 // pred_region
      %35 = dma.done [#allocation3], 256
    $region13: #{tpu_custom_call.1} parent=1 // pred_fallthru
      _
    // Predicated region
    $region14: #{tpu_custom_call.1} parent=1 // pred_check
      _
    $region15: #{tpu_custom_call.1} parent=1 // pred_check_branch
      %37 = sbr.rel (0) target = $region17
    $region16: #{tpu_custom_call.1} parent=1 // pred_region
      %38 = dma.done [#allocation6], 256
    $region17: #{tpu_custom_call.1} parent=1 // pred_fallthru
      _
    %v39 = vld [vmem:[#allocation2] sm:$0xff]
    %v40 = vld [vmem:[#allocation2 + $0x8] sm:$0xff]
    %41 = vst [vmem:[#allocation7] sm:$0xff] %v39
    %42 = vst [vmem:[#allocation7 + $0x8] sm:$0xff] %v40
    %v43 = vld [vmem:[#allocation5] sm:$0xff]
    %v44 = vld [vmem:[#allocation5 + $0x8] sm:$0xff]
    %45 = vst [vmem:[#allocation8] sm:$0xff] %v43
    %46 = vst [vmem:[#allocation8 + $0x8] sm:$0xff] %v44
    // Predicated region
    $region18: #{tpu_custom_call.1} parent=1 // pred_check
      _
    $region19: #{tpu_custom_call.1} parent=1 // pred_check_branch
      %48 = sbr.rel (0) target = $region21
    $region20: #{tpu_custom_call.1} parent=1 // pred_region
      %s50 = ssub.s32 256, 256
      %51 = vsyncadd [#allocation4], %s50
      %s53 = sshll.u32 [#allocation7], 4
      %s54 = int_to_ptr.vmem [resolvable:$true] %s53
      %56 = dma.vmem_to_hbm [thread:$0]  %s54, 256, %s2, [#allocation4]
    $region21: #{tpu_custom_call.1} parent=1 // pred_fallthru
      _
    // Predicated region
    $region22: #{tpu_custom_call.1} parent=1 // pred_check
      _
    $region23: #{tpu_custom_call.1} parent=1 // pred_check_branch
      %58 = sbr.rel (0) target = $region25
    $region24: #{tpu_custom_call.1} parent=1 // pred_region
      %s60 = ssub.s32 256, 256
      %61 = vsyncadd [#allocation9], %s60
      %s63 = sshll.u32 [#allocation8], 4
      %s64 = int_to_ptr.vmem [resolvable:$true] %s63
      %66 = dma.vmem_to_hbm [thread:$0]  %s64, 256, %s3, [#allocation9]
    $region25: #{tpu_custom_call.1} parent=1 // pred_fallthru
      _
    // Predicated region
    $region26: #{tpu_custom_call.1} parent=1 // pred_check
      _
    $region27: #{tpu_custom_call.1} parent=1 // pred_check_branch
      %68 = sbr.rel (0) target = $region29
    $region28: #{tpu_custom_call.1} parent=1 // pred_region
      %69 = dma.done [#allocation4], 256
    $region29: #{tpu_custom_call.1} parent=1 // pred_fallthru
      _
    // Predicated region
    $region30: #{tpu_custom_call.1} parent=1 // pred_check
      _
    $region31: #{tpu_custom_call.1} parent=1 // pred_check_branch
      %71 = sbr.rel (0) target = $region33
    $region32: #{tpu_custom_call.1} parent=1 // pred_region
      %72 = dma.done [#allocation9], 256
    $region33: #{tpu_custom_call.1} parent=1 // pred_fallthru
      _
    %73 = vsyncpa [#allocation3], 1
    %74 = vsyncpa [#allocation6], 1
    %75 = vsyncpa [#allocation4], 1
    %76 = vsyncpa [#allocation9], 1

</llo_original>
